<compile_context>
chip_gen: v6e
topology: v6e:2x2x1
jax: 0.10.0
libtpu: 0.0.40
codegen_flags: <defaults>
</compile_context>

<pallas_src>
import functools

import jax
import jax.numpy as jnp
from jax.experimental import pallas as pl
from jax.experimental.pallas import tpu as pltpu


def _round_up(n, m):
    return ((n + m - 1) // m) * m


def _vmem_capacity_bytes():
    """Per-core VMEM capacity; conservative fallback if detection fails."""
    try:
        info = pltpu.get_tpu_info()
        cap = getattr(info, "vmem_capacity_bytes", None)
        if cap:
            return int(cap)
    except Exception:
        pass
    return 64 << 20  # v7x per-core VMEM: safe lower bound on every chip


def _pick_tn(D, tile_cols):
    """Largest multiple of 128 that divides D and is <= tile_cols (>=128)."""
    best = 128
    cand = 128
    while cand <= min(tile_cols, D):
        if D % cand == 0:
            best = cand
        cand += 128
    return best


def _layer_norm_f32(x_f32, g_ref, b_ref, eps):
    """PyTorch-exact LayerNorm (unbiased std, eps added to std), f32 math."""
    d = x_f32.shape[-1]
    mean = jnp.mean(x_f32, axis=-1, keepdims=True)
    diff = x_f32 - mean
    var_unbiased = jnp.sum(diff * diff, axis=-1, keepdims=True) / (d - 1)
    std = jnp.sqrt(var_unbiased)
    inv = pl.reciprocal(std + eps, approx=False)  # per-row recip, broadcast mul
    return (g_ref[...].astype(jnp.float32) * diff) * inv + b_ref[...].astype(jnp.float32)


def _sc_kernel_resident(x_ref, g_ref, b_ref, w_ref, wb_ref, o_ref, *, eps):
    # x_ref : (TM, D) row tile      w_ref : (D, D) resident weights
    # g/b   : (1, D)  LN params     wb    : (1, D) dense bias
    x = x_ref[...].astype(jnp.float32)
    y = _layer_norm_f32(x, g_ref, b_ref, eps)
    sub = jnp.dot(y.astype(w_ref.dtype), w_ref[...],
                  preferred_element_type=jnp.float32)
    sub = sub + wb_ref[...].astype(jnp.float32)
    # dropout (eval mode) = identity; residual add in f32
    o_ref[...] = (x + sub).astype(o_ref.dtype)


def _sc_kernel_streamed(x_ref, g_ref, b_ref, w_ref, wb_ref, o_ref, y_ref, *,
                        eps, tn):
    # x_ref : (TM, D)  full-width row tile (LN input AND residual source)
    # w_ref : (D, TN)  streamed weight column tile
    # wb_ref: (1, TN)  dense-bias column tile
    # y_ref : (TM, D)  VMEM scratch: LayerNorm(x) in W's dtype, written at j==0
    j = pl.program_id(1)

    @pl.when(j == 0)
    def _():
        y = _layer_norm_f32(x_ref[...].astype(jnp.float32), g_ref, b_ref, eps)
        y_ref[...] = y.astype(y_ref.dtype)

    sub = jnp.dot(y_ref[...], w_ref[...], preferred_element_type=jnp.float32)
    sub = sub + wb_ref[...].astype(jnp.float32)

    # Residual comes from the already-resident row tile: x is read from HBM once.
    col = pl.multiple_of(j * tn, 128)
    res = x_ref[:, pl.ds(col, tn)]
    o_ref[...] = (res.astype(jnp.float32) + sub).astype(o_ref.dtype)


def sublayer_connection(x, a_2, b_2, w, wb, *, eps=1e-6,
                        tile_rows=None, tile_cols=512, w_resident=None):
    """x: (B, S, D). Returns x + Dense(LayerNorm(x)) with PyTorch-exact LayerNorm.

    tile_rows / tile_cols / w_resident default to an auto, VMEM-budgeted choice.
    """
    B, S, D = x.shape
    assert D % 128 == 0, "hidden dim must be a multiple of 128"
    # TODO(synk): pad + mask the hidden dim when D % 128 != 0 (keep output lane-dense)

    M = B * S
    x_it = x.dtype.itemsize
    w_it = w.dtype.itemsize
    o_it = x_it

    vmem_limit = min(int(_vmem_capacity_bytes() * 3 // 4), 100 << 20)
    vmem_limit = max(vmem_limit, 32 << 20)
    budget = int(vmem_limit * 0.9)          # headroom for compiler scratch

    # --- resident-W fast path decision: W read from HBM exactly once ---
    w_bytes = D * D * w_it
    if w_resident is None:
        w_resident = w_bytes <= budget // 3

    tn = None if w_resident else _pick_tn(D, tile_cols)

    small = 4 * D * 4 + 2 * D * w_it        # LN params + bias buffers (tiny)

    def fits_resident(tm):
        return (2 * tm * D * x_it + w_bytes + 2 * tm * D * o_it + small) <= budget

    def fits_streamed(tm, x_bufs):
        return (x_bufs * tm * D * x_it      # full-width x row tile
                + tm * D * w_it             # LN scratch (W's dtype)
                + 2 * D * tn * w_it         # streamed W column tile (dbl-buffered)
                + 2 * tm * tn * o_it        # output tile (dbl-buffered)
                + small) <= budget

    # --- row tile: as large as the budget allows, but keep >= 2 row blocks so
    #     the "parallel" axis can feed both TensorCores on megacore chips. ---
    x_bufs = 2
    if tile_rows is not None:
        tm = max(8, min(_round_up(tile_rows, 8), _round_up(M, 8)))
    else:
        max_tm = max(8, _round_up(-(-M // 2), 8))
        cands = [t for t in (1024, 768, 512, 384, 256, 128, 64, 32, 16, 8)
                 if t <= max_tm] or [8]
        tm = cands[-1]
        for t in cands:                      # descending: biggest tile that fits
            if w_resident:
                if fits_resident(t):
                    tm = t
                    break
            else:
                if fits_streamed(t, 2):
                    tm, x_bufs = t, 2
                    break
                if fits_streamed(t, 1):      # single-buffer x to afford bigger tm
                    tm, x_bufs = t, 1
                    break

    M_pad = _round_up(M, tm)
    x2 = x.reshape(M, D)
    if M_pad != M:
        x2 = jnp.pad(x2, ((0, M_pad - M), (0, 0)))

    a2 = a_2.reshape(1, D)
    b2 = b_2.reshape(1, D)
    wb2 = wb.reshape(1, D)

    if w_resident:
        out2 = pl.pallas_call(
            functools.partial(_sc_kernel_resident, eps=eps),
            out_shape=jax.ShapeDtypeStruct((M_pad, D), x.dtype),
            grid_spec=pltpu.PrefetchScalarGridSpec(
                num_scalar_prefetch=0,
                grid=(M_pad // tm,),
                in_specs=[
                    pl.BlockSpec((tm, D), lambda i: (i, 0)),
                    pl.BlockSpec((1, D), lambda i: (0, 0),
                                 pipeline_mode=pl.Buffered(1)),
                    pl.BlockSpec((1, D), lambda i: (0, 0),
                                 pipeline_mode=pl.Buffered(1)),
                    pl.BlockSpec((D, D), lambda i: (0, 0),
                                 pipeline_mode=pl.Buffered(1)),
                    pl.BlockSpec((1, D), lambda i: (0, 0),
                                 pipeline_mode=pl.Buffered(1)),
                ],
                out_specs=pl.BlockSpec((tm, D), lambda i: (i, 0)),
            ),
            compiler_params=pltpu.CompilerParams(
                dimension_semantics=("parallel",),
                vmem_limit_bytes=vmem_limit,
            ),
        )(x2, a2, b2, w, wb2)
    else:
        if x_bufs == 1:
            xr_spec = pl.BlockSpec((tm, D), lambda i, j: (i, 0),
                                   pipeline_mode=pl.Buffered(1))
        else:
            xr_spec = pl.BlockSpec((tm, D), lambda i, j: (i, 0))
        out2 = pl.pallas_call(
            functools.partial(_sc_kernel_streamed, eps=eps, tn=tn),
            out_shape=jax.ShapeDtypeStruct((M_pad, D), x.dtype),
            grid_spec=pltpu.PrefetchScalarGridSpec(
                num_scalar_prefetch=0,
                grid=(M_pad // tm, D // tn),
                in_specs=[
                    xr_spec,
                    pl.BlockSpec((1, D), lambda i, j: (0, 0),
                                 pipeline_mode=pl.Buffered(1)),
                    pl.BlockSpec((1, D), lambda i, j: (0, 0),
                                 pipeline_mode=pl.Buffered(1)),
                    pl.BlockSpec((D, tn), lambda i, j: (0, j)),
                    pl.BlockSpec((1, tn), lambda i, j: (0, j)),
                ],
                out_specs=pl.BlockSpec((tm, tn), lambda i, j: (i, j)),
                scratch_shapes=[pltpu.VMEM((tm, D), w.dtype)],  # LayerNorm(x)
            ),
            compiler_params=pltpu.CompilerParams(
                dimension_semantics=("parallel", "arbitrary"),
                vmem_limit_bytes=vmem_limit,
            ),
        )(x2, a2, b2, w, wb2)

    return out2[:M].reshape(B, S, D)


def _reference(x, a_2, b_2, w, wb, eps=1e-6):
    xf = x.astype(jnp.float32)
    mean = jnp.mean(xf, axis=-1, keepdims=True)
    diff = xf - mean
    var = jnp.sum(diff * diff, axis=-1, keepdims=True) / (xf.shape[-1] - 1)
    std = jnp.sqrt(var)
    y = a_2 * diff / (std + eps) + b_2
    sub = y @ w + wb
    return (xf + sub).astype(x.dtype)


if __name__ == "__main__":
    key = jax.random.PRNGKey(0)

    # --- test 1: resident-W fast path, 2 row tiles (parallel axis >= 2) ---
    B, S, D = 2, 8, 128  # batch, seq, hidden ("size" of SublayerConnection)
    k1, k2, k3, key = jax.random.split(key, 4)
    x = jax.random.normal(k1, (B, S, D), dtype=jnp.float32)
    a_2 = jnp.ones((D,), dtype=jnp.float32)       # LayerNorm init: ones / zeros
    b_2 = jnp.zeros((D,), dtype=jnp.float32)
    w = jax.random.normal(k2, (D, D), dtype=jnp.float32) * (1.0 / jnp.sqrt(D))
    wb = jax.random.normal(k3, (D,), dtype=jnp.float32) * 0.01

    out = jax.block_until_ready(sublayer_connection(x, a_2, b_2, w, wb))
    ref = _reference(x, a_2, b_2, w, wb)
    assert out.shape == (B, S, D)
    assert jnp.allclose(out, ref, atol=1e-4, rtol=1e-4)

    # --- test 2: streamed-W multi-tile path (forced), with row padding:
    #     M=40 rows -> tm=16 (padded to 48), D=256 split into two 128-wide
    #     weight column tiles; exercises the LN-scratch reuse across j and the
    #     dynamic lane-slice residual. ---
    B, S, D = 2, 20, 256
    k1, k2, k3, key = jax.random.split(key, 4)
    x = jax.random.normal(k1, (B, S, D), dtype=jnp.float32)
    a_2 = 1.0 + 0.1 * jax.random.normal(k2, (D,), dtype=jnp.float32)
    b_2 = 0.1 * jax.random.normal(k3, (D,), dtype=jnp.float32)
    k1, k2, key = jax.random.split(key, 3)
    w = jax.random.normal(k1, (D, D), dtype=jnp.float32) * (1.0 / jnp.sqrt(D))
    wb = jax.random.normal(k2, (D,), dtype=jnp.float32) * 0.01

    out = jax.block_until_ready(
        sublayer_connection(x, a_2, b_2, w, wb,
                            w_resident=False, tile_rows=16, tile_cols=128))
    ref = _reference(x, a_2, b_2, w, wb)
    assert out.shape == (B, S, D)
    assert jnp.allclose(out, ref, atol=1e-4, rtol=1e-4)

    print("KERNEL_OK")
</pallas_src>

<mosaic_0001>
module attributes {stable_mosaic.version = 11 : i64} {
  func.func @_sc_kernel_resident(%arg0: i32, %arg1: memref<8x128xf32, #tpu.memory_space<vmem>>, %arg2: memref<1x128xf32, #tpu.memory_space<vmem>>, %arg3: memref<1x128xf32, #tpu.memory_space<vmem>>, %arg4: memref<128x128xf32, #tpu.memory_space<vmem>>, %arg5: memref<1x128xf32, #tpu.memory_space<vmem>>, %arg6: memref<8x128xf32, #tpu.memory_space<vmem>>) attributes {dimension_semantics = [#tpu.dimension_semantics<parallel>], iteration_bounds = array<i64: 2>, scalar_prefetch = 0 : i64, scratch_operands = 0 : i64, tpu.core_type = #tpu.core_type<tc>, window_params = [{transform_indices = @transform_0, window_bounds = array<i64: 8, 128>}, {pipeline_mode = #tpu.pipeline_mode<synchronous>, transform_indices = @transform_1, window_bounds = array<i64: 1, 128>}, {pipeline_mode = #tpu.pipeline_mode<synchronous>, transform_indices = @transform_2, window_bounds = array<i64: 1, 128>}, {pipeline_mode = #tpu.pipeline_mode<synchronous>, transform_indices = @transform_3, window_bounds = array<i64: 128, 128>}, {pipeline_mode = #tpu.pipeline_mode<synchronous>, transform_indices = @transform_4, window_bounds = array<i64: 1, 128>}, {transform_indices = @transform_5, window_bounds = array<i64: 8, 128>}]} {
    %c0 = arith.constant 0 : index
    %c0_0 = arith.constant 0 : index
    %0 = vector.load %arg1[%c0, %c0_0] : memref<8x128xf32, #tpu.memory_space<vmem>>, vector<8x128xf32>
    %cst = arith.constant dense<0.000000e+00> : vector<8xf32>
    %1 = vector.multi_reduction <add>, %0, %cst [1] : vector<8x128xf32> to vector<8xf32>
    %2 = vector.shape_cast %1 : vector<8xf32> to vector<8x1xf32>
    %cst_1 = arith.constant 1.280000e+02 : f32
    %3 = vector.broadcast %cst_1 : f32 to vector<8x1xf32>
    %4 = arith.divf %2, %3 : vector<8x1xf32>
    %5 = vector.broadcast %4 : vector<8x1xf32> to vector<8x128xf32>
    %6 = arith.subf %0, %5 : vector<8x128xf32>
    %7 = arith.mulf %6, %6 : vector<8x128xf32>
    %cst_2 = arith.constant dense<0.000000e+00> : vector<8xf32>
    %8 = vector.multi_reduction <add>, %7, %cst_2 [1] : vector<8x128xf32> to vector<8xf32>
    %9 = vector.shape_cast %8 : vector<8xf32> to vector<8x1xf32>
    %cst_3 = arith.constant 1.270000e+02 : f32
    %10 = vector.broadcast %cst_3 : f32 to vector<8x1xf32>
    %11 = arith.divf %9, %10 : vector<8x1xf32>
    %12 = math.sqrt %11 : vector<8x1xf32>
    %cst_4 = arith.constant 9.99999997E-7 : f32
    %13 = vector.broadcast %cst_4 : f32 to vector<8x1xf32>
    %14 = arith.addf %12, %13 : vector<8x1xf32>
    %15 = tpu.reciprocal %14 : vector<8x1xf32> -> vector<8x1xf32>
    %c0_5 = arith.constant 0 : index
    %c0_6 = arith.constant 0 : index
    %16 = vector.load %arg2[%c0_5, %c0_6] : memref<1x128xf32, #tpu.memory_space<vmem>>, vector<1x128xf32>
    %17 = vector.broadcast %16 : vector<1x128xf32> to vector<8x128xf32>
    %18 = arith.mulf %17, %6 : vector<8x128xf32>
    %19 = vector.broadcast %15 : vector<8x1xf32> to vector<8x128xf32>
    %20 = arith.mulf %18, %19 : vector<8x128xf32>
    %c0_7 = arith.constant 0 : index
    %c0_8 = arith.constant 0 : index
    %21 = vector.load %arg3[%c0_7, %c0_8] : memref<1x128xf32, #tpu.memory_space<vmem>>, vector<1x128xf32>
    %22 = vector.broadcast %21 : vector<1x128xf32> to vector<8x128xf32>
    %23 = arith.addf %20, %22 : vector<8x128xf32>
    %c0_9 = arith.constant 0 : index
    %c0_10 = arith.constant 0 : index
    %24 = vector.load %arg4[%c0_9, %c0_10] : memref<128x128xf32, #tpu.memory_space<vmem>>, vector<128x128xf32>
    %cst_11 = arith.constant dense<0.000000e+00> : vector<8x128xf32>
    %25 = tpu.matmul %23, %24, %cst_11 {dimension_numbers = #tpu.dot_dimension_numbers<[1], [0], [0], [1], [0, 0, 1, 1], [], []>} : vector<8x128xf32>, vector<128x128xf32>, vector<8x128xf32> -> vector<8x128xf32>
    %c0_12 = arith.constant 0 : index
    %c0_13 = arith.constant 0 : index
    %26 = vector.load %arg5[%c0_12, %c0_13] : memref<1x128xf32, #tpu.memory_space<vmem>>, vector<1x128xf32>
    %27 = vector.broadcast %26 : vector<1x128xf32> to vector<8x128xf32>
    %28 = arith.addf %25, %27 : vector<8x128xf32>
    %29 = arith.addf %0, %28 : vector<8x128xf32>
    %c0_14 = arith.constant 0 : index
    %c0_15 = arith.constant 0 : index
    %30 = vector.load %arg6[%c0_14, %c0_15] : memref<8x128xf32, #tpu.memory_space<vmem>>, vector<8x128xf32>
    tpu.vector_store %arg6[%c0_14, %c0_15], %29 {strides = array<i32>} : memref<8x128xf32, #tpu.memory_space<vmem>>, vector<8x128xf32>,
    return
  }
  func.func @transform_0(%arg0: i32) -> (i32, i32) {
    %c0_i32 = arith.constant 0 : i32
    %c0_i32_0 = arith.constant 0 : i32
    return %arg0, %c0_i32 : i32, i32
  }
  func.func @transform_1(%arg0: i32) -> (i32, i32) {
    %c0_i32 = arith.constant 0 : i32
    %c0_i32_0 = arith.constant 0 : i32
    %c0_i32_1 = arith.constant 0 : i32
    return %c0_i32, %c0_i32_0 : i32, i32
  }
  func.func @transform_2(%arg0: i32) -> (i32, i32) {
    %c0_i32 = arith.constant 0 : i32
    %c0_i32_0 = arith.constant 0 : i32
    %c0_i32_1 = arith.constant 0 : i32
    return %c0_i32, %c0_i32_0 : i32, i32
  }
  func.func @transform_3(%arg0: i32) -> (i32, i32) {
    %c0_i32 = arith.constant 0 : i32
    %c0_i32_0 = arith.constant 0 : i32
    %c0_i32_1 = arith.constant 0 : i32
    return %c0_i32, %c0_i32_0 : i32, i32
  }
  func.func @transform_4(%arg0: i32) -> (i32, i32) {
    %c0_i32 = arith.constant 0 : i32
    %c0_i32_0 = arith.constant 0 : i32
    %c0_i32_1 = arith.constant 0 : i32
    return %c0_i32, %c0_i32_0 : i32, i32
  }
  func.func @transform_5(%arg0: i32) -> (i32, i32) {
    %c0_i32 = arith.constant 0 : i32
    %c0_i32_0 = arith.constant 0 : i32
    return %arg0, %c0_i32 : i32, i32
  }
}

</mosaic_0001>

<llo_original>
// kernel: tpu_custom_call.1
$region0: #{tpu_custom_call.1}
  #allocation0 [shape = 'u32[]', space=smem, size = 0x4, offset = 0x4, fixed_abs, tag = 'smem constant byte address 0x4 - core index']
  #allocation1 [shape = 'u32[144,128]{1,0:T(1,128)}', space=vmem, size = 0x12000, scoped, tag = 'internal scratch']
  %s0 = inlined_call_operand.hbm [shape: f32[16,128], index: 0, kind: input, shape index: {}]
  %s1 = inlined_call_operand.vmem [shape: f32[1,128], index: 1, kind: input, shape index: {}]
  %s2 = inlined_call_operand.vmem [shape: f32[1,128], index: 2, kind: input, shape index: {}]
  %s3 = inlined_call_operand.hbm [shape: f32[128,128], index: 3, kind: input, shape index: {}]
  %s4 = inlined_call_operand.vmem [shape: f32[1,128], index: 4, kind: input, shape index: {}]
  %s5 = inlined_call_operand.hbm [shape: f32[16,128], index: 5, kind: output, shape index: {}]
  %s6 = sld [smem:[#allocation0]]
  $region61: #{tpu_custom_call.1} parent=0
    _
  %s8 = ssub.s32 1, %s6
  %s9 = scalar_select 0, %s8, %s6
  $region1: #{tpu_custom_call.1} parent=0
    #allocation2 [shape = 'u8[8192]{0}', space=vmem, size = 0x2000, scoped, tag = 'input window, operand 0']
    #allocation3 [shape = 's32[2]{0}', space=sflag, size = 0x8, scoped, tag = 'scoped memory for tpu_custom_call.1']
    #allocation4 [shape = 's32[2]{0}', space=sflag, size = 0x8, scoped, tag = 'scoped memory for tpu_custom_call.1']
    #allocation5 [shape = 'u8[65536]{0}', space=vmem, size = 0x10000, scoped, tag = 'input window, operand 3, single buffered']
    #allocation6 [shape = 's32[1]{0}', space=sflag, size = 0x4, scoped, tag = 'scoped memory for tpu_custom_call.1']
    #allocation7 [shape = 'u8[8192]{0}', space=vmem, size = 0x2000, scoped, tag = 'output window, operand 0']
    %10 = vsyncpa [#allocation3], 0
    %s11 = scalar_lea.sflag [#allocation3], 1
    %12 = vsyncpa %s11, 0
    %13 = vsyncpa [#allocation6], 0
    %14 = vsyncpa [#allocation4], 0
    %s15 = scalar_lea.sflag [#allocation4], 1
    %16 = vsyncpa %s15, 0
    loop: start=0, step=1, limit=4
    $region2: #{tpu_custom_call.1} parent=1 // loop_pre_header
      _
    $region3: #{tpu_custom_call.1} parent=1 // loop_header
      %s18 = sphi 0, %s22
      %p19 = scmp.ge.s32.totalorder %s18, 4
      %s28 = sphi 0, %s30
      %s31 = sphi 0, %s28
      %s32 = sphi 0, %s31
      %s48 = sphi 0, %s32
      %s52 = sphi 0, %s52
      %s54 = sphi 0, %s52
      %s55 = sphi 0, %s54
      %s69 = sphi 0, %s55
      %s73 = sphi 0, %s73
      %s75 = sphi 0, %s73
      %s76 = sphi 0, %s75
      %s90 = sphi 0, %s76
      %s94 = sphi 0, %s94
      %s96 = sphi 0, %s94
      %s97 = sphi 0, %s96
      %s111 = sphi 0, %s97
      %s115 = sphi 0, %s115
      %s117 = sphi 0, %s115
      %s118 = sphi 0, %s117
      %s132 = sphi 0, %s118
      %s138 = sphi 0, %s140
      %s141 = sphi 0, %s138
      %s142 = sphi 0, %s141
      %s158 = sphi 0, %s142
    $region4: #{tpu_custom_call.1} parent=1 // loop_header_branch
      %21 = sbr.rel (%p19) target = $region8
    $region5: #{tpu_custom_call.1} parent=1 // loop_body
      %s23 = ssub.s32 %s18, 1
      %s24 = ssub.s32 %s18, 2
      %s25 = sadd.s32 %s18, 1
      %s26 = ssub.s32 %s18, %s25
      %p27 = scmp.eq.s32.totalorder %s26, 0
      %s29 = sadd.s32 %s28, 1
      %s30 = scalar_select %p27, %s28, %s29
      %p33 = pneg %p27
      %p34 = scmp.eq.s32.totalorder %s18, 1
      %p35 = por %p33, %p34
      %p36 = scmp.ne.s32.totalorder %s28, %s31
      %p37 = scmp.eq.s32.totalorder %s18, 0
      %p38 = por %p36, %p37
      %p39 = scmp.ne.s32.totalorder %s28, %s31
      %p40 = scmp.eq.s32.totalorder %s23, 1
      %p41 = por %p39, %p40
      %p42 = scmp.ne.s32.totalorder %s31, %s32
      %p43 = scmp.eq.s32.totalorder %s23, 0
      %p44 = por %p42, %p43
      %p45 = scmp.ne.s32.totalorder %s31, %s32
      %p46 = scmp.eq.s32.totalorder %s24, 1
      %p47 = por %p45, %p46
      %p49 = scmp.ne.s32.totalorder %s32, %s48
      %p50 = scmp.eq.s32.totalorder %s24, 0
      %p51 = por %p49, %p50
      %s53 = sadd.s32 %s52, 1
      %p56 = scmp.eq.s32.totalorder %s18, 1
      %p57 = scmp.ne.s32.totalorder %s52, %s54
      %p58 = scmp.eq.s32.totalorder %s18, 0
      %p59 = por %p57, %p58
      %p60 = scmp.ne.s32.totalorder %s52, %s54
      %p61 = scmp.eq.s32.totalorder %s23, 1
      %p62 = por %p60, %p61
      %p63 = scmp.ne.s32.totalorder %s54, %s55
      %p64 = scmp.eq.s32.totalorder %s23, 0
      %p65 = por %p63, %p64
      %p66 = scmp.ne.s32.totalorder %s54, %s55
      %p67 = scmp.eq.s32.totalorder %s24, 1
      %p68 = por %p66, %p67
      %p70 = scmp.ne.s32.totalorder %s55, %s69
      %p71 = scmp.eq.s32.totalorder %s24, 0
      %p72 = por %p70, %p71
      %s74 = sadd.s32 %s73, 1
      %p77 = scmp.eq.s32.totalorder %s18, 1
      %p78 = scmp.ne.s32.totalorder %s73, %s75
      %p79 = scmp.eq.s32.totalorder %s18, 0
      %p80 = por %p78, %p79
      %p81 = scmp.ne.s32.totalorder %s73, %s75
      %p82 = scmp.eq.s32.totalorder %s23, 1
      %p83 = por %p81, %p82
      %p84 = scmp.ne.s32.totalorder %s75, %s76
      %p85 = scmp.eq.s32.totalorder %s23, 0
      %p86 = por %p84, %p85
      %p87 = scmp.ne.s32.totalorder %s75, %s76
      %p88 = scmp.eq.s32.totalorder %s24, 1
      %p89 = por %p87, %p88
      %p91 = scmp.ne.s32.totalorder %s76, %s90
      %p92 = scmp.eq.s32.totalorder %s24, 0
      %p93 = por %p91, %p92
      %s95 = sadd.s32 %s94, 1
      %p98 = scmp.eq.s32.totalorder %s18, 1
      %p99 = scmp.ne.s32.totalorder %s94, %s96
      %p100 = scmp.eq.s32.totalorder %s18, 0
      %p101 = por %p99, %p100
      %p102 = scmp.ne.s32.totalorder %s94, %s96
      %p103 = scmp.eq.s32.totalorder %s23, 1
      %p104 = por %p102, %p103
      %p105 = scmp.ne.s32.totalorder %s96, %s97
      %p106 = scmp.eq.s32.totalorder %s23, 0
      %p107 = por %p105, %p106
      %p108 = scmp.ne.s32.totalorder %s96, %s97
      %p109 = scmp.eq.s32.totalorder %s24, 1
      %p110 = por %p108, %p109
      %p112 = scmp.ne.s32.totalorder %s97, %s111
      %p113 = scmp.eq.s32.totalorder %s24, 0
      %p114 = por %p112, %p113
      %s116 = sadd.s32 %s115, 1
      %p119 = scmp.eq.s32.totalorder %s18, 1
      %p120 = scmp.ne.s32.totalorder %s115, %s117
      %p121 = scmp.eq.s32.totalorder %s18, 0
      %p122 = por %p120, %p121
      %p123 = scmp.ne.s32.totalorder %s115, %s117
      %p124 = scmp.eq.s32.totalorder %s23, 1
      %p125 = por %p123, %p124
      %p126 = scmp.ne.s32.totalorder %s117, %s118
      %p127 = scmp.eq.s32.totalorder %s23, 0
      %p128 = por %p126, %p127
      %p129 = scmp.ne.s32.totalorder %s117, %s118
      %p130 = scmp.eq.s32.totalorder %s24, 1
      %p131 = por %p129, %p130
      %p133 = scmp.ne.s32.totalorder %s118, %s132
      %p134 = scmp.eq.s32.totalorder %s24, 0
      %p135 = por %p133, %p134
      %s136 = ssub.s32 %s18, %s25
      %p137 = scmp.eq.s32.totalorder %s136, 0
      %s139 = sadd.s32 %s138, 1
      %s140 = scalar_select %p137, %s138, %s139
      %p143 = pneg %p137
      %p144 = scmp.eq.s32.totalorder %s18, 1
      %p145 = por %p143, %p144
      %p146 = scmp.ne.s32.totalorder %s138, %s141
      %p147 = scmp.eq.s32.totalorder %s18, 0
      %p148 = por %p146, %p147
      %p149 = scmp.ne.s32.totalorder %s138, %s141
      %p150 = scmp.eq.s32.totalorder %s23, 1
      %p151 = por %p149, %p150
      %p152 = scmp.ne.s32.totalorder %s141, %s142
      %p153 = scmp.eq.s32.totalorder %s23, 0
      %p154 = por %p152, %p153
      %p155 = scmp.ne.s32.totalorder %s141, %s142
      %p156 = scmp.eq.s32.totalorder %s24, 1
      %p157 = por %p155, %p156
      %p159 = scmp.ne.s32.totalorder %s142, %s158
      %p160 = scmp.eq.s32.totalorder %s24, 0
      %p161 = por %p159, %p160
      %p162 = scmp.le.s32.totalorder 1, %s18
      %p163 = scmp.lt.s32.totalorder %s18, 3
      %p164 = pnand %p162, %p163
      %p165 = pneg %p164
      // Predicated region
      $region9: #{tpu_custom_call.1} parent=5 // pred_check
        _
      $region10: #{tpu_custom_call.1} parent=5 // pred_check_branch
        %167 = sbr.rel (%p164) target = $region12
      $region11: #{tpu_custom_call.1} parent=5 // pred_region
        %s168 = ssub.s32 %s18, 1
        // Predicated region
        $region13: #{tpu_custom_call.1} parent=11 // pred_check
          %p169 = pneg %p65
        $region14: #{tpu_custom_call.1} parent=11 // pred_check_branch
          %171 = sbr.rel (%p169) target = $region16
        $region15: #{tpu_custom_call.1} parent=11 // pred_region
          _
        $region16: #{tpu_custom_call.1} parent=11 // pred_fallthru
          _
        // Predicated region
        $region17: #{tpu_custom_call.1} parent=11 // pred_check
          %p172 = pneg %p86
        $region18: #{tpu_custom_call.1} parent=11 // pred_check_branch
          %174 = sbr.rel (%p172) target = $region20
        $region19: #{tpu_custom_call.1} parent=11 // pred_region
          _
        $region20: #{tpu_custom_call.1} parent=11 // pred_fallthru
          _
        // Predicated region
        $region21: #{tpu_custom_call.1} parent=11 // pred_check
          %p175 = pneg %p107
        $region22: #{tpu_custom_call.1} parent=11 // pred_check_branch
          %177 = sbr.rel (%p175) target = $region24
        $region23: #{tpu_custom_call.1} parent=11 // pred_region
          %s179 = ssub.s32 2048, 2048
          %180 = vsyncadd [#allocation6], %s179
          %s181 = sshll.u32 [#allocation5], 4
          %s182 = int_to_ptr.vmem [resolvable:$true] %s181
          %187 = dma.hbm_to_vmem [thread:$0]  %s3, 2048, %s182, [#allocation6], 128, 128, 8
        $region24: #{tpu_custom_call.1} parent=11 // pred_fallthru
          _
        // Predicated region
        $region25: #{tpu_custom_call.1} parent=11 // pred_check
          %p188 = pneg %p128
        $region26: #{tpu_custom_call.1} parent=11 // pred_check_branch
          %190 = sbr.rel (%p188) target = $region28
        $region27: #{tpu_custom_call.1} parent=11 // pred_region
          _
        $region28: #{tpu_custom_call.1} parent=11 // pred_fallthru
          _
      $region12: #{tpu_custom_call.1} parent=5 // pred_fallthru
        _
      %p191 = scmp.lt.s32.totalorder %s18, 2
      // Predicated region
      $region29: #{tpu_custom_call.1} parent=5 // pred_check
        %p192 = pneg %p191
      $region30: #{tpu_custom_call.1} parent=5 // pred_check_branch
        %194 = sbr.rel (%p192) target = $region32
      $region31: #{tpu_custom_call.1} parent=5 // pred_region
        // Predicated region
        $region33: #{tpu_custom_call.1} parent=31 // pred_check
          %p195 = pneg %p38
        $region34: #{tpu_custom_call.1} parent=31 // pred_check_branch
          %197 = sbr.rel (%p195) target = $region36
        $region35: #{tpu_custom_call.1} parent=31 // pred_region
          %s198 = sand.u32 %s28, 1
          %s199 = scalar_lea.sflag [#allocation3], %s198
          %s200 = sand.u32 %s28, 1
          %s201 = smul.addr %s200, 8
          %s202 = scalar_lea.vmem [#allocation2], %s201
          %s204 = ssub.s32 128, 128
          %205 = vsyncadd %s199, %s204
          %s206 = smul.addr %s18, 128
          %s207 = scalar_lea.hbm %s0, %s206
          %s209 = sshll.u32 %s202, 4
          %s210 = int_to_ptr.vmem [resolvable:$true] %s209
          %212 = dma.hbm_to_vmem [thread:$0]  %s207, 128, %s210, %s199
        $region36: #{tpu_custom_call.1} parent=31 // pred_fallthru
          _
      $region32: #{tpu_custom_call.1} parent=5 // pred_fallthru
        _
      %p213 = scmp.le.s32.totalorder 1, %s18
      %p214 = scmp.lt.s32.totalorder %s18, 3
      %p215 = pnand %p213, %p214
      %p216 = pneg %p215
      // Predicated region
      $region37: #{tpu_custom_call.1} parent=5 // pred_check
        _
      $region38: #{tpu_custom_call.1} parent=5 // pred_check_branch
        %218 = sbr.rel (%p215) target = $region40
      $region39: #{tpu_custom_call.1} parent=5 // pred_region
        %s219 = ssub.s32 %s18, 1
        %s220 = sand.u32 %s31, 1
        %s221 = scalar_lea.sflag [#allocation3], %s220
        %s222 = sand.u32 %s31, 1
        %s223 = smul.addr %s222, 8
        %s224 = scalar_lea.vmem [#allocation2], %s223
        // Predicated region
        $region41: #{tpu_custom_call.1} parent=39 // pred_check
          %p225 = pneg %p44
        $region42: #{tpu_custom_call.1} parent=39 // pred_check_branch
          %227 = sbr.rel (%p225) target = $region44
        $region43: #{tpu_custom_call.1} parent=39 // pred_region
          %228 = dma.done %s221, 128
        $region44: #{tpu_custom_call.1} parent=39 // pred_fallthru
          _
        // Predicated region
        $region45: #{tpu_custom_call.1} parent=39 // pred_check
          %p229 = pneg %p107
        $region46: #{tpu_custom_call.1} parent=39 // pred_check_branch
          %231 = sbr.rel (%p229) target = $region48
        $region47: #{tpu_custom_call.1} parent=39 // pred_region
          %232 = dma.done [#allocation6], 2048
        $region48: #{tpu_custom_call.1} parent=39 // pred_fallthru
          _
        %s233 = sand.u32 %s31, 1
        %s234 = scalar_lea.sflag [#allocation3], %s233
        %s235 = sand.u32 %s31, 1
        %s236 = smul.addr %s235, 8
        %s237 = scalar_lea.vmem [#allocation2], %s236
        %p238 = pneg %p44
        %p239 = pneg %p41
        %p240 = pneg %p65
        %p241 = pneg %p62
        %p242 = pneg %p86
        %p243 = pneg %p83
        %p244 = pneg %p107
        %p245 = pneg %p104
        %p246 = pneg %p128
        %p247 = pneg %p125
        %p248 = pneg %p154
        %p249 = pneg %p151
        %s250 = sand.u32 %s141, 1
        %s251 = scalar_lea.sflag [#allocation4], %s250
        %s252 = sand.u32 %s141, 1
        %s253 = smul.addr %s252, 8
        %s254 = scalar_lea.vmem [#allocation7], %s253
        %v255 = vld [vmem:[%s224] sm:$0xff]
        %256 = vadd.xlane.f32.xlu0 %v255
        %v257 = vpop.xlane.xlu0 %256
        %v258 = vrcp.pop 128.0
        %v259 = vmul.f32 %v257, %v258
        %v260 = vsub.f32 %v255, %v259
        %v261 = vmul.f32 %v260, %v260
        %262 = vadd.xlane.f32.xlu0 %v261
        %v263 = vpop.xlane.xlu0 %262
        %v264 = vrcp.pop 127.0
        %v265 = vmul.f32 %v263, %v264
        %v266 = vrsqrt.pop %v265
        %v267 = vmul.f32 %v265, %v266
        %vm268 = vcmp.eq.f32.partialorder %v265, inf
        %v269 = vsel %vm268, %v265, %v267
        %vm270 = vcmp.eq.f32.partialorder %v265, 0.0
        %v271 = vand.u32 %v265, 2147483648
        %v272 = vsel %vm270, %v271, %v269
        %v273 = vadd.f32 %v272, 1e-06
        %v274 = vrcp.pop %v273
        %v275 = vld [vmem:[%s1] sm:$0x1]
        %v277 = vlaneseq
        %v278 = vshrl.u32 %v277, 7
        %v279 = vsub.s32 0, %v278
        %v280 = vrot.slane %v275, %v279
        %v282 = vmul.f32 %v280, %v260
        %v283 = vmul.f32 %v282, %v274
        %v284 = vld [vmem:[%s2] sm:$0x1]
        %v286 = vlaneseq
        %v287 = vshrl.u32 %v286, 7
        %v288 = vsub.s32 0, %v287
        %v289 = vrot.slane %v284, %v288
        %v291 = vadd.f32 %v283, %v289
        %v292 = vld [vmem:[#allocation5] sm:$0xff]
        %v293 = vld [vmem:[#allocation5 + $0x8] sm:$0xff]
        %v294 = vld [vmem:[#allocation5 + $0x10] sm:$0xff]
        %v295 = vld [vmem:[#allocation5 + $0x18] sm:$0xff]
        %v296 = vld [vmem:[#allocation5 + $0x20] sm:$0xff]
        %v297 = vld [vmem:[#allocation5 + $0x28] sm:$0xff]
        %v298 = vld [vmem:[#allocation5 + $0x30] sm:$0xff]
        %v299 = vld [vmem:[#allocation5 + $0x38] sm:$0xff]
        %v300 = vld [vmem:[#allocation5 + $0x40] sm:$0xff]
        %v301 = vld [vmem:[#allocation5 + $0x48] sm:$0xff]
        %v302 = vld [vmem:[#allocation5 + $0x50] sm:$0xff]
        %v303 = vld [vmem:[#allocation5 + $0x58] sm:$0xff]
        %v304 = vld [vmem:[#allocation5 + $0x60] sm:$0xff]
        %v305 = vld [vmem:[#allocation5 + $0x68] sm:$0xff]
        %v306 = vld [vmem:[#allocation5 + $0x70] sm:$0xff]
        %v307 = vld [vmem:[#allocation5 + $0x78] sm:$0xff]
        %v308 = vld [vmem:[%s4] sm:$0x1]
        %v310 = vlaneseq
        %v311 = vshrl.u32 %v310, 7
        %v312 = vsub.s32 0, %v311
        %v313 = vrot.slane %v308, %v312
        %315 = vmatprep.subr.mxu0 0.0
        %316 = vmatpush1.msra.mxu0 %v307
        %317 = vmatprep.subr.mxu0 0.0
        %318 = vmatpush1.msra.mxu0 %v306
        %319 = vmatprep.subr.mxu0 0.0
        %320 = vmatpush1.msra.mxu0 %v305
        %321 = vmatprep.subr.mxu0 0.0
        %322 = vmatpush1.msra.mxu0 %v304
        %323 = vmatprep.subr.mxu0 0.0
        %324 = vmatpush1.msra.mxu0 %v303
        %325 = vmatprep.subr.mxu0 0.0
        %326 = vmatpush1.msra.mxu0 %v302
        %327 = vmatprep.subr.mxu0 0.0
        %328 = vmatpush1.msra.mxu0 %v301
        %329 = vmatprep.subr.mxu0 0.0
        %330 = vmatpush1.msra.mxu0 %v300
        %331 = vmatprep.subr.mxu0 0.0
        %332 = vmatpush1.msra.mxu0 %v299
        %333 = vmatprep.subr.mxu0 0.0
        %334 = vmatpush1.msra.mxu0 %v298
        %335 = vmatprep.subr.mxu0 0.0
        %336 = vmatpush1.msra.mxu0 %v297
        %337 = vmatprep.subr.mxu0 0.0
        %338 = vmatpush1.msra.mxu0 %v296
        %339 = vmatprep.subr.mxu0 0.0
        %340 = vmatpush1.msra.mxu0 %v295
        %341 = vmatprep.subr.mxu0 0.0
        %342 = vmatpush1.msra.mxu0 %v294
        %343 = vmatprep.subr.mxu0 0.0
        %344 = vmatpush1.msra.mxu0 %v293
        %345 = vmatprep.subr.mxu0 0.0
        %346 = vmatpush1.msra.mxu0 %v292
        %347 = vmatprep.subr.mxu0 0.0
        %348 = vmatpush2.msra.mxu0 0.0
        %349 = vmatprep.subr.mxu0 0.0
        %350 = vmatpush2.msra.mxu0 0.0
        %351 = vmatprep.subr.mxu0 0.0
        %352 = vmatpush2.msra.mxu0 0.0
        %353 = vmatprep.subr.mxu0 0.0
        %354 = vmatpush2.msra.mxu0 0.0
        %355 = vmatprep.subr.mxu0 0.0
        %356 = vmatpush2.msra.mxu0 0.0
        %357 = vmatprep.subr.mxu0 0.0
        %358 = vmatpush2.msra.mxu0 0.0
        %359 = vmatprep.subr.mxu0 0.0
        %360 = vmatpush2.msra.mxu0 0.0
        %361 = vmatprep.subr.mxu0 0.0
        %362 = vmatpush2.msra.mxu0 0.0
        %363 = vmatprep.subr.mxu0 0.0
        %364 = vmatpush2.msra.mxu0 0.0
        %365 = vmatprep.subr.mxu0 0.0
        %366 = vmatpush2.msra.mxu0 0.0
        %367 = vmatprep.subr.mxu0 0.0
        %368 = vmatpush2.msra.mxu0 0.0
        %369 = vmatprep.subr.mxu0 0.0
        %370 = vmatpush2.msra.mxu0 0.0
        %371 = vmatprep.subr.mxu0 0.0
        %372 = vmatpush2.msra.mxu0 0.0
        %373 = vmatprep.subr.mxu0 0.0
        %374 = vmatpush2.msra.mxu0 0.0
        %375 = vmatprep.subr.mxu0 0.0
        %376 = vmatpush2.msra.mxu0 0.0
        %377 = vmatprep.subr.mxu0 0.0
        %378 = vmatpush2.msra.mxu0 0.0
        %379 = vmatprep.mubr.f32.mxu0 0.0
        %380 = vmatmul.mubr.f32.gmra.mxu0 %v291
        %v381 = vpop.f32.mrf.mxu0
        %v382 = vadd.f32 %v313, %v381
        %v383 = vpop.f32.mrf.mxu0
        %384 = vdwg.mxu0
        %v385 = vadd.f32 %v255, %v382
        %386 = vst [vmem:[%s254] sm:$0xff] %v385
        %s387 = sand.u32 %s141, 1
        %s388 = scalar_lea.sflag [#allocation4], %s387
        %s389 = sand.u32 %s141, 1
        %s390 = smul.addr %s389, 8
        %s391 = scalar_lea.vmem [#allocation7], %s390
        // Predicated region
        $region49: #{tpu_custom_call.1} parent=39 // pred_check
          %p392 = pneg %p151
        $region50: #{tpu_custom_call.1} parent=39 // pred_check_branch
          %394 = sbr.rel (%p392) target = $region52
        $region51: #{tpu_custom_call.1} parent=39 // pred_region
          %s396 = ssub.s32 128, 128
          %397 = vsyncadd %s388, %s396
          %s398 = smul.addr %s23, 128
          %s399 = scalar_lea.hbm %s5, %s398
          %s401 = sshll.u32 %s391, 4
          %s402 = int_to_ptr.vmem [resolvable:$true] %s401
          %404 = dma.vmem_to_hbm [thread:$0]  %s402, 128, %s399, %s388
        $region52: #{tpu_custom_call.1} parent=39 // pred_fallthru
          _
      $region40: #{tpu_custom_call.1} parent=5 // pred_fallthru
        _
      %p405 = scmp.le.s32.totalorder 2, %s18
      // Predicated region
      $region53: #{tpu_custom_call.1} parent=5 // pred_check
        %p406 = pneg %p405
      $region54: #{tpu_custom_call.1} parent=5 // pred_check_branch
        %408 = sbr.rel (%p406) target = $region56
      $region55: #{tpu_custom_call.1} parent=5 // pred_region
        %s409 = ssub.s32 %s18, 2
        // Predicated region
        $region57: #{tpu_custom_call.1} parent=55 // pred_check
          %p410 = pneg %p157
        $region58: #{tpu_custom_call.1} parent=55 // pred_check_branch
          %412 = sbr.rel (%p410) target = $region60
        $region59: #{tpu_custom_call.1} parent=55 // pred_region
          %s413 = sand.u32 %s142, 1
          %s414 = scalar_lea.sflag [#allocation4], %s413
          %s415 = sand.u32 %s142, 1
          %s416 = smul.addr %s415, 8
          %s417 = scalar_lea.vmem [#allocation7], %s416
          %418 = dma.done %s414, 128
        $region60: #{tpu_custom_call.1} parent=55 // pred_fallthru
          _
      $region56: #{tpu_custom_call.1} parent=5 // pred_fallthru
        _
    $region6: #{tpu_custom_call.1} parent=1 // loop_footer
      %s22 = sadd.s32 1, %s18
    $region7: #{tpu_custom_call.1} parent=1 // loop_footer_branch
      %17 = sbr.rel target = $region3
    $region8: #{tpu_custom_call.1} parent=1 // loop_exit
      _
    %419 = vsyncpa [#allocation3], 1
    %s420 = scalar_lea.sflag [#allocation3], 1
    %421 = vsyncpa %s420, 1
    %422 = vsyncpa [#allocation6], 1
    %423 = vsyncpa [#allocation4], 1
    %s424 = scalar_lea.sflag [#allocation4], 1
    %425 = vsyncpa %s424, 1

</llo_original>
